<compile_context>
chip_gen: v5e
topology: v5e:2x2
jax: 0.10.0
libtpu: 0.0.40
codegen_flags: <defaults>
</compile_context>

<pallas_src>
import functools

import jax
import jax.numpy as jnp
from jax.experimental import pallas as pl
from jax.experimental.pallas import tpu as pltpu


# --------------------------------------------------------------------------
# Kernel
# --------------------------------------------------------------------------
def _avg_consensus_kernel(x_ref, o_ref, *, inv_t):
    # x_ref: (Bn, T, Cblk) block in VMEM; o_ref: (Bn, Cblk) block.
    x = x_ref[...]
    if jnp.dtype(x.dtype).itemsize < 4:
        # Accumulate sub-32-bit inputs (e.g. bf16 / fp16) in f32.
        x = x.astype(jnp.float32)
    # Sum over the segment axis, then one scalar multiply (VPU) for the mean.
    o_ref[...] = (jnp.sum(x, axis=1) * inv_t).astype(o_ref.dtype)


# --------------------------------------------------------------------------
# Block-size selection
# --------------------------------------------------------------------------
def _pick_cblk(c):
    """Largest lane-aligned chunk that evenly divides C; else full C."""
    for cand in (4096, 2048, 1024, 512, 256, 128):
        if cand <= c and c % cand == 0:
            return cand
    return c  # block dim == full array dim is always legal


def _pick_bn(n, t, cblk, itemsize, budget_bytes=4 * 1024 * 1024):
    """Largest multiple-of-8 divisor of N whose (Bn, T, Cblk) input block fits
    the per-buffer budget (double-buffering must still fit scoped VMEM on
    v5e/v6e/v7x); falls back to the full batch dim."""
    per_row = max(1, t * cblk * itemsize)
    max_bn = max(1, budget_bytes // per_row)
    best = None
    b = 8
    while b <= n:
        if n % b == 0 and b <= max_bn:
            best = b
        b += 8
    return best if best is not None else n


# --------------------------------------------------------------------------
# Wrapper
# --------------------------------------------------------------------------
def segment_consensus(x, consensus_type="avg", dim=1):
    """JAX/Pallas implementation of SegmentConsensus.forward.

    x: (N, T, C) array; reduction over `dim` (Pallas fast-path for dim=1)."""
    if consensus_type == "rnn":
        consensus_type = "identity"

    if consensus_type == "identity":
        return x

    if consensus_type != "avg":
        # Matches the PyTorch module: unknown consensus_type -> None output.
        return None

    itemsize = jnp.dtype(x.dtype).itemsize

    # Non-canonical layouts or tiny / sub-128-lane inputs: plain XLA is
    # strictly faster than a pallas_call with fixed overhead / masked vregs.
    if x.ndim != 3 or dim != 1:
        out = jnp.mean(x.astype(jnp.float32), axis=dim, keepdims=True)
        return out.astype(x.dtype)

    N, T, C = x.shape
    if C < 128 or (N * T * C * itemsize) < (1 << 16):
        out = jnp.mean(x.astype(jnp.float32), axis=1, keepdims=True)
        return out.astype(x.dtype)

    cblk = _pick_cblk(C)
    bn = _pick_bn(N, T, cblk, itemsize)
    # cblk and bn are exact divisors (or equal the full dim) by construction.
    grid = (pl.cdiv(N, bn), pl.cdiv(C, cblk))

    kernel = functools.partial(_avg_consensus_kernel, inv_t=1.0 / float(T))

    out2d = pl.pallas_call(
        kernel,
        out_shape=jax.ShapeDtypeStruct((N, C), x.dtype),
        grid_spec=pltpu.PrefetchScalarGridSpec(
            num_scalar_prefetch=0,
            grid=grid,
            in_specs=[pl.BlockSpec((bn, T, cblk), lambda n, c: (n, 0, c))],
            out_specs=pl.BlockSpec((bn, cblk), lambda n, c: (n, c)),
        ),
        compiler_params=pltpu.CompilerParams(
            dimension_semantics=("parallel", "parallel"),
        ),
        cost_estimate=pl.CostEstimate(
            flops=N * T * C,
            transcendentals=0,
            bytes_accessed=N * T * C * itemsize + N * C * itemsize,
        ),
    )(x)

    # keepdim=True semantics of the PyTorch module.
    return out2d.reshape(N, 1, C)


class ConsensusModule:
    """JAX/Pallas counterpart of the PyTorch ConsensusModule (no parameters)."""

    def __init__(self, consensus_type, dim=1):
        self.consensus_type = (
            consensus_type if consensus_type != "rnn" else "identity"
        )
        self.dim = dim

    def __call__(self, x):
        return segment_consensus(x, self.consensus_type, self.dim)


# --------------------------------------------------------------------------
# Self-test
# --------------------------------------------------------------------------
if __name__ == "__main__":
    key = jax.random.PRNGKey(0)

    # --- Pallas 'avg' path: (batch=8, num_segments=8, features=512), f32 ---
    x = jax.random.normal(key, (8, 8, 512), dtype=jnp.float32)
    avg_mod = ConsensusModule("avg", dim=1)
    y_avg = jax.block_until_ready(avg_mod(x))
    ref_avg = jnp.mean(x, axis=1, keepdims=True)
    assert y_avg.shape == (8, 1, 512)
    assert jnp.allclose(y_avg, ref_avg, atol=1e-5, rtol=1e-5)

    # --- Pallas 'avg' path with bf16 input (native-dtype streaming) ---
    x_bf = x.astype(jnp.bfloat16)
    y_bf = jax.block_until_ready(avg_mod(x_bf))
    ref_bf = jnp.mean(x_bf.astype(jnp.float32), axis=1, keepdims=True)
    assert y_bf.shape == (8, 1, 512)
    assert jnp.allclose(y_bf.astype(jnp.float32), ref_bf, atol=2e-2, rtol=2e-2)

    # --- Small-shape fallback path (C < 128) ---
    x_small = jax.random.normal(jax.random.PRNGKey(1), (2, 8, 32),
                                dtype=jnp.float32)
    y_small = jax.block_until_ready(avg_mod(x_small))
    ref_small = jnp.mean(x_small, axis=1, keepdims=True)
    assert y_small.shape == (2, 1, 32)
    assert jnp.allclose(y_small, ref_small, atol=1e-6, rtol=1e-6)

    # --- 'identity' (and 'rnn') consensus: pure pass-through ---
    id_mod = ConsensusModule("identity", dim=1)
    y_id = jax.block_until_ready(id_mod(x))
    assert y_id.shape == x.shape
    assert jnp.allclose(y_id, x)

    rnn_mod = ConsensusModule("rnn", dim=1)
    y_rnn = jax.block_until_ready(rnn_mod(x))
    assert jnp.allclose(y_rnn, x)

    print("KERNEL_OK")
</pallas_src>

<mosaic_0001>
module attributes {stable_mosaic.version = 11 : i64} {
  func.func @_avg_consensus_kernel(%arg0: i32, %arg1: i32, %arg2: memref<8x8x512xf32, #tpu.memory_space<vmem>>, %arg3: memref<8x512xf32, #tpu.memory_space<vmem>>) attributes {dimension_semantics = [#tpu.dimension_semantics<parallel>, #tpu.dimension_semantics<parallel>], iteration_bounds = array<i64: 1, 1>, scalar_prefetch = 0 : i64, scratch_operands = 0 : i64, tpu.core_type = #tpu.core_type<tc>, window_params = [{transform_indices = @transform_0, window_bounds = array<i64: 8, 8, 512>}, {transform_indices = @transform_1, window_bounds = array<i64: 8, 512>}]} {
    %c0 = arith.constant 0 : index
    %c0_0 = arith.constant 0 : index
    %c0_1 = arith.constant 0 : index
    %0 = vector.load %arg2[%c0, %c0_0, %c0_1] : memref<8x8x512xf32, #tpu.memory_space<vmem>>, vector<8x8x512xf32>
    %cst = arith.constant dense<0.000000e+00> : vector<8x512xf32>
    %1 = vector.multi_reduction <add>, %0, %cst [1] : vector<8x8x512xf32> to vector<8x512xf32>
    %cst_2 = arith.constant 1.250000e-01 : f32
    %2 = vector.broadcast %cst_2 : f32 to vector<8x512xf32>
    %3 = arith.mulf %1, %2 : vector<8x512xf32>
    %c0_3 = arith.constant 0 : index
    %c0_4 = arith.constant 0 : index
    %4 = vector.load %arg3[%c0_3, %c0_4] : memref<8x512xf32, #tpu.memory_space<vmem>>, vector<8x512xf32>
    tpu.vector_store %arg3[%c0_3, %c0_4], %3 {strides = array<i32>} : memref<8x512xf32, #tpu.memory_space<vmem>>, vector<8x512xf32>,
    return
  }
  func.func @transform_0(%arg0: i32, %arg1: i32) -> (i32, i32, i32) {
    %c0_i32 = arith.constant 0 : i32
    %c0_i32_0 = arith.constant 0 : i32
    return %arg0, %c0_i32, %arg1 : i32, i32, i32
  }
  func.func @transform_1(%arg0: i32, %arg1: i32) -> (i32, i32) {
    %c0_i32 = arith.constant 0 : i32
    return %arg0, %arg1 : i32, i32
  }
}

</mosaic_0001>

<llo_original>
// kernel: tpu_custom_call.1
$region0: #{tpu_custom_call.1}
  #allocation0 [shape = 'u32[]', space=smem, size = 0x4, offset = 0x4, fixed_abs, tag = 'smem constant byte address 0x4 - core index']
  #allocation1 [shape = 'u32[72,128]{1,0:T(1,128)}', space=vmem, size = 0x9000, scoped, tag = 'internal scratch']
  %s0 = inlined_call_operand.hbm [shape: f32[8,8,512], index: 0, kind: input, shape index: {}]
  %s1 = inlined_call_operand.hbm [shape: f32[8,512], index: 1, kind: output, shape index: {}]
  %s2 = sld [smem:[#allocation0]]
  $region18: #{tpu_custom_call.1} parent=0
    _
  %s4 = ssub.s32 1, %s2
  %s5 = scalar_select 0, %s4, %s2
  $region1: #{tpu_custom_call.1} parent=0
    #allocation2 [shape = 'u8[131072]{0}', space=vmem, size = 0x20000, scoped, tag = 'input window, operand 0, single buffered']
    #allocation3 [shape = 's32[1]{0}', space=sflag, size = 0x4, scoped, tag = 'scoped memory for tpu_custom_call.1']
    #allocation4 [shape = 's32[1]{0}', space=sflag, size = 0x4, scoped, tag = 'scoped memory for tpu_custom_call.1']
    #allocation5 [shape = 'u8[16384]{0}', space=vmem, size = 0x4000, scoped, tag = 'output window, operand 0, single buffered']
    %6 = vsyncpa [#allocation3], 0
    %7 = vsyncpa [#allocation4], 0
    // Predicated region
    $region2: #{tpu_custom_call.1} parent=1 // pred_check
      _
    $region3: #{tpu_custom_call.1} parent=1 // pred_check_branch
      %9 = sbr.rel (0) target = $region5
    $region4: #{tpu_custom_call.1} parent=1 // pred_region
      %11 = vsyncadd [#allocation3], 0
      %s12 = sshll.u32 %s0, 4
      %s13 = int_to_ptr.hbm [resolvable:$true] %s12
      %s14 = sshll.u32 [#allocation2], 4
      %s15 = int_to_ptr.vmem [resolvable:$true] %s14
      %20 = dma.hbm_to_vmem [thread:$0]  %s13, 4096, %s15, [#allocation3], 512, 512, 32
    $region5: #{tpu_custom_call.1} parent=1 // pred_fallthru
      _
    // Predicated region
    $region6: #{tpu_custom_call.1} parent=1 // pred_check
      _
    $region7: #{tpu_custom_call.1} parent=1 // pred_check_branch
      %22 = sbr.rel (0) target = $region9
    $region8: #{tpu_custom_call.1} parent=1 // pred_region
      %24 = dma.done [#allocation3], 4096
    $region9: #{tpu_custom_call.1} parent=1 // pred_fallthru
      _
    %v25 = vld [vmem:[#allocation2] sm:$0xff]
    %v26 = vld [vmem:[#allocation2 + $0x8] sm:$0xff]
    %v27 = vld [vmem:[#allocation2 + $0x10] sm:$0xff]
    %v28 = vld [vmem:[#allocation2 + $0x18] sm:$0xff]
    %v29 = vld [vmem:[#allocation2 + $0x20] sm:$0xff]
    %v30 = vld [vmem:[#allocation2 + $0x28] sm:$0xff]
    %v31 = vld [vmem:[#allocation2 + $0x30] sm:$0xff]
    %v32 = vld [vmem:[#allocation2 + $0x38] sm:$0xff]
    %v33 = vld [vmem:[#allocation2 + $0x40] sm:$0xff]
    %v34 = vld [vmem:[#allocation2 + $0x48] sm:$0xff]
    %v35 = vld [vmem:[#allocation2 + $0x50] sm:$0xff]
    %v36 = vld [vmem:[#allocation2 + $0x58] sm:$0xff]
    %v37 = vld [vmem:[#allocation2 + $0x60] sm:$0xff]
    %v38 = vld [vmem:[#allocation2 + $0x68] sm:$0xff]
    %v39 = vld [vmem:[#allocation2 + $0x70] sm:$0xff]
    %v40 = vld [vmem:[#allocation2 + $0x78] sm:$0xff]
    %v41 = vld [vmem:[#allocation2 + $0x80] sm:$0xff]
    %v42 = vld [vmem:[#allocation2 + $0x88] sm:$0xff]
    %v43 = vld [vmem:[#allocation2 + $0x90] sm:$0xff]
    %v44 = vld [vmem:[#allocation2 + $0x98] sm:$0xff]
    %v45 = vld [vmem:[#allocation2 + $0xa0] sm:$0xff]
    %v46 = vld [vmem:[#allocation2 + $0xa8] sm:$0xff]
    %v47 = vld [vmem:[#allocation2 + $0xb0] sm:$0xff]
    %v48 = vld [vmem:[#allocation2 + $0xb8] sm:$0xff]
    %v49 = vld [vmem:[#allocation2 + $0xc0] sm:$0xff]
    %v50 = vld [vmem:[#allocation2 + $0xc8] sm:$0xff]
    %v51 = vld [vmem:[#allocation2 + $0xd0] sm:$0xff]
    %v52 = vld [vmem:[#allocation2 + $0xd8] sm:$0xff]
    %v53 = vld [vmem:[#allocation2 + $0xe0] sm:$0xff]
    %v54 = vld [vmem:[#allocation2 + $0xe8] sm:$0xff]
    %v55 = vld [vmem:[#allocation2 + $0xf0] sm:$0xff]
    %v56 = vld [vmem:[#allocation2 + $0xf8] sm:$0xff]
    %v57 = vrot.slane %v25, 4
    %v58 = vadd.f32 %v25, %v57
    %v59 = vrot.slane %v58, 2
    %v60 = vadd.f32 %v58, %v59
    %v61 = vrot.slane %v60, 1
    %v62 = vadd.f32 %v60, %v61
    %v63 = vrot.slane %v26, 4
    %v64 = vadd.f32 %v26, %v63
    %v65 = vrot.slane %v64, 2
    %v66 = vadd.f32 %v64, %v65
    %v67 = vrot.slane %v66, 1
    %v68 = vadd.f32 %v66, %v67
    %v69 = vrot.slane %v27, 4
    %v70 = vadd.f32 %v27, %v69
    %v71 = vrot.slane %v70, 2
    %v72 = vadd.f32 %v70, %v71
    %v73 = vrot.slane %v72, 1
    %v74 = vadd.f32 %v72, %v73
    %v75 = vrot.slane %v28, 4
    %v76 = vadd.f32 %v28, %v75
    %v77 = vrot.slane %v76, 2
    %v78 = vadd.f32 %v76, %v77
    %v79 = vrot.slane %v78, 1
    %v80 = vadd.f32 %v78, %v79
    %v81 = vrot.slane %v29, 4
    %v82 = vadd.f32 %v29, %v81
    %v83 = vrot.slane %v82, 2
    %v84 = vadd.f32 %v82, %v83
    %v85 = vrot.slane %v84, 1
    %v86 = vadd.f32 %v84, %v85
    %v87 = vrot.slane %v30, 4
    %v88 = vadd.f32 %v30, %v87
    %v89 = vrot.slane %v88, 2
    %v90 = vadd.f32 %v88, %v89
    %v91 = vrot.slane %v90, 1
    %v92 = vadd.f32 %v90, %v91
    %v93 = vrot.slane %v31, 4
    %v94 = vadd.f32 %v31, %v93
    %v95 = vrot.slane %v94, 2
    %v96 = vadd.f32 %v94, %v95
    %v97 = vrot.slane %v96, 1
    %v98 = vadd.f32 %v96, %v97
    %v99 = vrot.slane %v32, 4
    %v100 = vadd.f32 %v32, %v99
    %v101 = vrot.slane %v100, 2
    %v102 = vadd.f32 %v100, %v101
    %v103 = vrot.slane %v102, 1
    %v104 = vadd.f32 %v102, %v103
    %v105 = vrot.slane %v33, 4
    %v106 = vadd.f32 %v33, %v105
    %v107 = vrot.slane %v106, 2
    %v108 = vadd.f32 %v106, %v107
    %v109 = vrot.slane %v108, 1
    %v110 = vadd.f32 %v108, %v109
    %v111 = vrot.slane %v34, 4
    %v112 = vadd.f32 %v34, %v111
    %v113 = vrot.slane %v112, 2
    %v114 = vadd.f32 %v112, %v113
    %v115 = vrot.slane %v114, 1
    %v116 = vadd.f32 %v114, %v115
    %v117 = vrot.slane %v35, 4
    %v118 = vadd.f32 %v35, %v117
    %v119 = vrot.slane %v118, 2
    %v120 = vadd.f32 %v118, %v119
    %v121 = vrot.slane %v120, 1
    %v122 = vadd.f32 %v120, %v121
    %v123 = vrot.slane %v36, 4
    %v124 = vadd.f32 %v36, %v123
    %v125 = vrot.slane %v124, 2
    %v126 = vadd.f32 %v124, %v125
    %v127 = vrot.slane %v126, 1
    %v128 = vadd.f32 %v126, %v127
    %v129 = vrot.slane %v37, 4
    %v130 = vadd.f32 %v37, %v129
    %v131 = vrot.slane %v130, 2
    %v132 = vadd.f32 %v130, %v131
    %v133 = vrot.slane %v132, 1
    %v134 = vadd.f32 %v132, %v133
    %v135 = vrot.slane %v38, 4
    %v136 = vadd.f32 %v38, %v135
    %v137 = vrot.slane %v136, 2
    %v138 = vadd.f32 %v136, %v137
    %v139 = vrot.slane %v138, 1
    %v140 = vadd.f32 %v138, %v139
    %v141 = vrot.slane %v39, 4
    %v142 = vadd.f32 %v39, %v141
    %v143 = vrot.slane %v142, 2
    %v144 = vadd.f32 %v142, %v143
    %v145 = vrot.slane %v144, 1
    %v146 = vadd.f32 %v144, %v145
    %v147 = vrot.slane %v40, 4
    %v148 = vadd.f32 %v40, %v147
    %v149 = vrot.slane %v148, 2
    %v150 = vadd.f32 %v148, %v149
    %v151 = vrot.slane %v150, 1
    %v152 = vadd.f32 %v150, %v151
    %v153 = vrot.slane %v41, 4
    %v154 = vadd.f32 %v41, %v153
    %v155 = vrot.slane %v154, 2
    %v156 = vadd.f32 %v154, %v155
    %v157 = vrot.slane %v156, 1
    %v158 = vadd.f32 %v156, %v157
    %v159 = vrot.slane %v42, 4
    %v160 = vadd.f32 %v42, %v159
    %v161 = vrot.slane %v160, 2
    %v162 = vadd.f32 %v160, %v161
    %v163 = vrot.slane %v162, 1
    %v164 = vadd.f32 %v162, %v163
    %v165 = vrot.slane %v43, 4
    %v166 = vadd.f32 %v43, %v165
    %v167 = vrot.slane %v166, 2
    %v168 = vadd.f32 %v166, %v167
    %v169 = vrot.slane %v168, 1
    %v170 = vadd.f32 %v168, %v169
    %v171 = vrot.slane %v44, 4
    %v172 = vadd.f32 %v44, %v171
    %v173 = vrot.slane %v172, 2
    %v174 = vadd.f32 %v172, %v173
    %v175 = vrot.slane %v174, 1
    %v176 = vadd.f32 %v174, %v175
    %v177 = vrot.slane %v45, 4
    %v178 = vadd.f32 %v45, %v177
    %v179 = vrot.slane %v178, 2
    %v180 = vadd.f32 %v178, %v179
    %v181 = vrot.slane %v180, 1
    %v182 = vadd.f32 %v180, %v181
    %v183 = vrot.slane %v46, 4
    %v184 = vadd.f32 %v46, %v183
    %v185 = vrot.slane %v184, 2
    %v186 = vadd.f32 %v184, %v185
    %v187 = vrot.slane %v186, 1
    %v188 = vadd.f32 %v186, %v187
    %v189 = vrot.slane %v47, 4
    %v190 = vadd.f32 %v47, %v189
    %v191 = vrot.slane %v190, 2
    %v192 = vadd.f32 %v190, %v191
    %v193 = vrot.slane %v192, 1
    %v194 = vadd.f32 %v192, %v193
    %v195 = vrot.slane %v48, 4
    %v196 = vadd.f32 %v48, %v195
    %v197 = vrot.slane %v196, 2
    %v198 = vadd.f32 %v196, %v197
    %v199 = vrot.slane %v198, 1
    %v200 = vadd.f32 %v198, %v199
    %v201 = vrot.slane %v49, 4
    %v202 = vadd.f32 %v49, %v201
    %v203 = vrot.slane %v202, 2
    %v204 = vadd.f32 %v202, %v203
    %v205 = vrot.slane %v204, 1
    %v206 = vadd.f32 %v204, %v205
    %v207 = vrot.slane %v50, 4
    %v208 = vadd.f32 %v50, %v207
    %v209 = vrot.slane %v208, 2
    %v210 = vadd.f32 %v208, %v209
    %v211 = vrot.slane %v210, 1
    %v212 = vadd.f32 %v210, %v211
    %v213 = vrot.slane %v51, 4
    %v214 = vadd.f32 %v51, %v213
    %v215 = vrot.slane %v214, 2
    %v216 = vadd.f32 %v214, %v215
    %v217 = vrot.slane %v216, 1
    %v218 = vadd.f32 %v216, %v217
    %v219 = vrot.slane %v52, 4
    %v220 = vadd.f32 %v52, %v219
    %v221 = vrot.slane %v220, 2
    %v222 = vadd.f32 %v220, %v221
    %v223 = vrot.slane %v222, 1
    %v224 = vadd.f32 %v222, %v223
    %v225 = vrot.slane %v53, 4
    %v226 = vadd.f32 %v53, %v225
    %v227 = vrot.slane %v226, 2
    %v228 = vadd.f32 %v226, %v227
    %v229 = vrot.slane %v228, 1
    %v230 = vadd.f32 %v228, %v229
    %v231 = vrot.slane %v54, 4
    %v232 = vadd.f32 %v54, %v231
    %v233 = vrot.slane %v232, 2
    %v234 = vadd.f32 %v232, %v233
    %v235 = vrot.slane %v234, 1
    %v236 = vadd.f32 %v234, %v235
    %v237 = vrot.slane %v55, 4
    %v238 = vadd.f32 %v55, %v237
    %v239 = vrot.slane %v238, 2
    %v240 = vadd.f32 %v238, %v239
    %v241 = vrot.slane %v240, 1
    %v242 = vadd.f32 %v240, %v241
    %v243 = vrot.slane %v56, 4
    %v244 = vadd.f32 %v56, %v243
    %v245 = vrot.slane %v244, 2
    %v246 = vadd.f32 %v244, %v245
    %v247 = vrot.slane %v246, 1
    %v248 = vadd.f32 %v246, %v247
    %v249 = vmul.f32 %v62, 0.125
    %v250 = vmul.f32 %v68, 0.125
    %v251 = vmul.f32 %v74, 0.125
    %v252 = vmul.f32 %v80, 0.125
    %v253 = vmul.f32 %v86, 0.125
    %v254 = vmul.f32 %v92, 0.125
    %v255 = vmul.f32 %v98, 0.125
    %v256 = vmul.f32 %v104, 0.125
    %v257 = vmul.f32 %v110, 0.125
    %v258 = vmul.f32 %v116, 0.125
    %v259 = vmul.f32 %v122, 0.125
    %v260 = vmul.f32 %v128, 0.125
    %v261 = vmul.f32 %v134, 0.125
    %v262 = vmul.f32 %v140, 0.125
    %v263 = vmul.f32 %v146, 0.125
    %v264 = vmul.f32 %v152, 0.125
    %v265 = vmul.f32 %v158, 0.125
    %v266 = vmul.f32 %v164, 0.125
    %v267 = vmul.f32 %v170, 0.125
    %v268 = vmul.f32 %v176, 0.125
    %v269 = vmul.f32 %v182, 0.125
    %v270 = vmul.f32 %v188, 0.125
    %v271 = vmul.f32 %v194, 0.125
    %v272 = vmul.f32 %v200, 0.125
    %v273 = vmul.f32 %v206, 0.125
    %v274 = vmul.f32 %v212, 0.125
    %v275 = vmul.f32 %v218, 0.125
    %v276 = vmul.f32 %v224, 0.125
    %v277 = vmul.f32 %v230, 0.125
    %v278 = vmul.f32 %v236, 0.125
    %v279 = vmul.f32 %v242, 0.125
    %v280 = vmul.f32 %v248, 0.125
    %vm313 = vcmask 1041409
    %v314 = vsel %vm313, %v253, %v249
    %vm315 = vcmask 1042434
    %v316 = vsel %vm315, %v257, %v314
    %vm317 = vcmask 1043459
    %v318 = vsel %vm317, %v261, %v316
    %vm319 = vcmask 1044484
    %v320 = vsel %vm319, %v265, %v318
    %vm321 = vcmask 1045509
    %v322 = vsel %vm321, %v269, %v320
    %vm323 = vcmask 1046534
    %v324 = vsel %vm323, %v273, %v322
    %vm325 = vcmask 1047559
    %v326 = vsel %vm325, %v277, %v324
    %v327 = vsel %vm313, %v254, %v250
    %v328 = vsel %vm315, %v258, %v327
    %v329 = vsel %vm317, %v262, %v328
    %v330 = vsel %vm319, %v266, %v329
    %v331 = vsel %vm321, %v270, %v330
    %v332 = vsel %vm323, %v274, %v331
    %v333 = vsel %vm325, %v278, %v332
    %v334 = vsel %vm313, %v255, %v251
    %v335 = vsel %vm315, %v259, %v334
    %v336 = vsel %vm317, %v263, %v335
    %v337 = vsel %vm319, %v267, %v336
    %v338 = vsel %vm321, %v271, %v337
    %v339 = vsel %vm323, %v275, %v338
    %v340 = vsel %vm325, %v279, %v339
    %v341 = vsel %vm313, %v256, %v252
    %v342 = vsel %vm315, %v260, %v341
    %v343 = vsel %vm317, %v264, %v342
    %v344 = vsel %vm319, %v268, %v343
    %v345 = vsel %vm321, %v272, %v344
    %v346 = vsel %vm323, %v276, %v345
    %v347 = vsel %vm325, %v280, %v346
    %352 = vst [vmem:[#allocation5] sm:$0xff] %v326
    %353 = vst [vmem:[#allocation5 + $0x8] sm:$0xff] %v333
    %354 = vst [vmem:[#allocation5 + $0x10] sm:$0xff] %v340
    %355 = vst [vmem:[#allocation5 + $0x18] sm:$0xff] %v347
    // Predicated region
    $region10: #{tpu_custom_call.1} parent=1 // pred_check
      _
    $region11: #{tpu_custom_call.1} parent=1 // pred_check_branch
      %357 = sbr.rel (0) target = $region13
    $region12: #{tpu_custom_call.1} parent=1 // pred_region
      %359 = vsyncadd [#allocation4], 0
      %s361 = sshll.u32 [#allocation5], 4
      %s362 = int_to_ptr.vmem [resolvable:$true] %s361
      %s363 = sshll.u32 %s1, 4
      %s364 = int_to_ptr.hbm [resolvable:$true] %s363
      %366 = dma.vmem_to_hbm [thread:$0]  %s362, 512, %s364, [#allocation4]
    $region13: #{tpu_custom_call.1} parent=1 // pred_fallthru
      _
    // Predicated region
    $region14: #{tpu_custom_call.1} parent=1 // pred_check
      _
    $region15: #{tpu_custom_call.1} parent=1 // pred_check_branch
      %368 = sbr.rel (0) target = $region17
    $region16: #{tpu_custom_call.1} parent=1 // pred_region
      %370 = dma.done [#allocation4], 512
    $region17: #{tpu_custom_call.1} parent=1 // pred_fallthru
      _
    %371 = vsyncpa [#allocation3], 1
    %372 = vsyncpa [#allocation4], 1

</llo_original>
